<compile_context>
chip_gen: v5e
topology: v5e:2x2
jax: 0.10.0
libtpu: 0.0.40
codegen_flags: <defaults>
</compile_context>

<pallas_src>
import jax
import jax.numpy as jnp
from jax import lax
from jax.experimental import pallas as pl
from jax.experimental.pallas import tpu as pltpu


_FORCE_TILE_BYTES = 4 << 20     # per-buffer force tile budget (8192 f32 rows)


def _cdiv(a, b):
    return (a + b - 1) // b


def _num_tensorcores():
    """2 on megacore chips (v4/v5p/v7x), else 1. Perf hint only; correctness
    never depends on it."""
    try:
        kind = jax.devices()[0].device_kind.lower()
    except Exception:
        return 1
    return 2 if any(tag in kind for tag in ("v4", "v5p", "v7", "tpu7")) else 1


def _make_kernel(inv_nc, inv_nta3, rows_valid, tile, tiles_per_core):
    def kernel(e_pred_ref, e_ref_ref, na_ref, f_pred_ref, f_ref_ref,
               out_ref, acc_ref):
        c = pl.program_id(0)          # per-TensorCore partial-sum row
        t = pl.program_id(1)          # force-reduction step

        @pl.when(t == 0)
        def _init():
            acc_ref[...] = jnp.zeros_like(acc_ref)

        # |F_pred - F_ref| over this (tile, 128) block.  Rows at/after
        # `rows_valid` (partial boundary block, or clamped duplicate blocks on
        # the unbalanced core) hold unspecified data and are masked to 0, so no
        # padded HBM copy of the force arrays is needed.
        row0 = (c * tiles_per_core + t) * tile
        grow = lax.broadcasted_iota(jnp.int32, (tile, 128), 0) + row0
        ff = (f_pred_ref[...].astype(jnp.float32)
              - f_ref_ref[...].astype(jnp.float32))
        ff = jnp.where(grow < rows_valid, jnp.abs(ff), 0.0)
        acc_ref[...] += jnp.sum(ff, axis=0, keepdims=True)

        @pl.when(t == pl.num_programs(1) - 1)
        def _finalize():
            loss_g = jnp.sum(acc_ref[...]) * inv_nta3
            lane = lax.broadcasted_iota(jnp.int32, (1, 1, 128), 2)

            @pl.when(c == 0)
            def _with_energy():
                # Tiny O(NC) branch: only core 0 pays for it, once.
                ee = ((e_pred_ref[...].astype(jnp.float32)
                       - e_ref_ref[...].astype(jnp.float32))
                      / na_ref[...].astype(jnp.float32))
                loss_e = jnp.sum(jnp.abs(ee)) * inv_nc
                out_ref[...] = jnp.where(
                    lane == 0, loss_e, jnp.where(lane == 1, loss_g, 0.0))

            @pl.when(c > 0)
            def _force_only():
                out_ref[...] = jnp.where(lane == 1, loss_g, 0.0)

    return kernel


def maef_loss(e_pred, e_ref, f_pred, f_ref, numatoms, *, tile_rows_max=None):
    """Pallas implementation of MAEFLoss.forward.

    Args:
      e_pred, e_ref, numatoms : (NC,)
      f_pred, f_ref           : (NTA, 3)
    Returns:
      (2,) float32 : [ sum|ee|/NC , sum|ff|/(3*NTA) ]
    """
    nc = int(e_pred.shape[0])
    nta = int(f_pred.shape[0])

    # ---- Energy operands: tiny lane-dense (rows_e, 128) slabs. --------------
    rows_e = max(1, _cdiv(nc, 128))
    pad_e = rows_e * 128 - nc

    def _energy_slab(x, fill):
        x = x.reshape(-1)
        if pad_e:
            x = jnp.pad(x, (0, pad_e), constant_values=fill)
        return x.reshape(rows_e, 128)

    e_pred2 = _energy_slab(e_pred, 0)
    e_ref2 = _energy_slab(e_ref, 0)
    na2 = _energy_slab(numatoms, 1)      # padded lanes contribute 0/1 = 0

    # ---- Force operands: flat (3*NTA,) -> (rows, 128). The reshape is free;
    # only the sub-128-element tail is ever padded (everything else is handled
    # by in-kernel row masking, not a padded HBM copy).
    n_force = 3 * nta
    rows = max(1, _cdiv(n_force, 128))
    pad_f = rows * 128 - n_force

    def _force_slab(x):
        x = x.reshape(-1)
        if pad_f:
            x = jnp.pad(x, (0, pad_f))
        return x.reshape(rows, 128)

    f_pred2 = _force_slab(f_pred)
    f_ref2 = _force_slab(f_ref)

    # ---- Tiling --------------------------------------------------------------
    f_itemsize = jnp.dtype(f_pred.dtype).itemsize
    sub_mult = max(8, 32 // max(1, f_itemsize))      # 8 f32 / 16 bf16 / 32 int8
    tile_max = max(sub_mult, _FORCE_TILE_BYTES // (128 * f_itemsize))
    if tile_rows_max is not None:
        tile_max = max(sub_mult, (int(tile_rows_max) // sub_mult) * sub_mult)

    if rows <= tile_max:
        tile = rows                      # single full-extent block (always legal)
    else:
        tile = tile_max                  # multiple of sub_mult by construction

    tiles_total = _cdiv(rows, tile)
    ncores = max(1, min(_num_tensorcores(), tiles_total))
    tiles_per_core = _cdiv(tiles_total, ncores)

    e_spec = pl.BlockSpec((rows_e, 128), lambda c, t: (0, 0))
    f_spec = pl.BlockSpec(
        (tile, 128),
        lambda c, t: (jnp.minimum(c * tiles_per_core + t, tiles_total - 1), 0))

    e_itemsize = jnp.dtype(e_pred.dtype).itemsize
    vmem_need = (4 * tile * 128 * f_itemsize          # 2 force inputs x 2 buffers
                 + 6 * rows_e * 128 * e_itemsize)     # 3 energy inputs x 2 buffers
    vmem_limit = int(min(48 << 20, max(32 << 20, vmem_need + (8 << 20))))

    out = pl.pallas_call(
        _make_kernel(1.0 / float(nc), 1.0 / (3.0 * float(nta)),
                     rows, tile, tiles_per_core),
        out_shape=jax.ShapeDtypeStruct((ncores, 1, 128), jnp.float32),
        grid=(ncores, tiles_per_core),
        in_specs=[e_spec, e_spec, e_spec, f_spec, f_spec],
        out_specs=pl.BlockSpec((1, 1, 128), lambda c, t: (c, 0, 0)),
        scratch_shapes=[pltpu.VMEM((1, 128), jnp.float32)],
        compiler_params=pltpu.CompilerParams(
            dimension_semantics=("parallel", "arbitrary"),
            vmem_limit_bytes=vmem_limit,
            # Let XLA fuse the (reshape + small pad) producers of the two force
            # operands into the pallas_call operand instead of materializing.
            allow_input_fusion=[False, False, False, True, True]),
    )(e_pred2, e_ref2, na2, f_pred2, f_ref2)

    # Sum per-core partial rows; lanes 0/1 carry [lossE/NC, lossG/(3*NTA)].
    return out[:, 0, :2].sum(axis=0)


def _reference(e_pred, e_ref, f_pred, f_ref, numatoms):
    nc = e_pred.shape[0]
    nta = f_pred.shape[0]
    ee = (e_pred - e_ref) / numatoms
    ff = f_pred - f_ref
    return jnp.concatenate([
        (jnp.sum(jnp.abs(ee)) / nc).reshape(-1),
        (jnp.sum(jnp.abs(ff)) / (3 * nta)).reshape(-1),
    ])


if __name__ == "__main__":
    key = jax.random.PRNGKey(0)
    k1, k2, k3, k4, k5 = jax.random.split(key, 5)

    NC = 8    # number of configurations
    NTA = 16  # total number of atoms

    e_pred = jax.random.normal(k1, (NC,), dtype=jnp.float32)
    e_ref = jax.random.normal(k2, (NC,), dtype=jnp.float32)
    f_pred = jax.random.normal(k3, (NTA, 3), dtype=jnp.float32)
    f_ref = jax.random.normal(k4, (NTA, 3), dtype=jnp.float32)
    numatoms = jax.random.randint(k5, (NC,), 2, 10).astype(jnp.float32)

    out = jax.block_until_ready(maef_loss(e_pred, e_ref, f_pred, f_ref, numatoms))
    ref = _reference(e_pred, e_ref, f_pred, f_ref, numatoms)
    assert out.shape == (2,)
    assert jnp.allclose(out, ref, rtol=1e-5, atol=1e-5), (out, ref)

    # Second (still small) case exercising the multi-tile grid, the partial
    # boundary block and the core-imbalance masking, via a tiny tile cap.
    NC2, NTA2 = 37, 1000
    kk = jax.random.split(jax.random.PRNGKey(1), 5)
    e_pred_b = jax.random.normal(kk[0], (NC2,), dtype=jnp.float32)
    e_ref_b = jax.random.normal(kk[1], (NC2,), dtype=jnp.float32)
    f_pred_b = jax.random.normal(kk[2], (NTA2, 3), dtype=jnp.float32)
    f_ref_b = jax.random.normal(kk[3], (NTA2, 3), dtype=jnp.float32)
    numatoms_b = jax.random.randint(kk[4], (NC2,), 2, 10).astype(jnp.float32)

    out_b = jax.block_until_ready(
        maef_loss(e_pred_b, e_ref_b, f_pred_b, f_ref_b, numatoms_b,
                  tile_rows_max=8))
    ref_b = _reference(e_pred_b, e_ref_b, f_pred_b, f_ref_b, numatoms_b)
    assert jnp.allclose(out_b, ref_b, rtol=1e-5, atol=1e-5), (out_b, ref_b)

    print("KERNEL_OK")
</pallas_src>

<mosaic_0001>
module attributes {stable_mosaic.version = 11 : i64} {
  func.func @kernel(%arg0: i32, %arg1: i32, %arg2: memref<1x128xf32, #tpu.memory_space<vmem>>, %arg3: memref<1x128xf32, #tpu.memory_space<vmem>>, %arg4: memref<1x128xf32, #tpu.memory_space<vmem>>, %arg5: memref<1x128xf32, #tpu.memory_space<vmem>>, %arg6: memref<1x128xf32, #tpu.memory_space<vmem>>, %arg7: memref<1x1x128xf32, #tpu.memory_space<vmem>>, %arg8: memref<1x128xf32, #tpu.memory_space<vmem>>) attributes {dimension_semantics = [#tpu.dimension_semantics<parallel>, #tpu.dimension_semantics<arbitrary>], iteration_bounds = array<i64: 1, 1>, scalar_prefetch = 0 : i64, scratch_operands = 1 : i64, tpu.core_type = #tpu.core_type<tc>, window_params = [{pipeline_mode = #tpu.pipeline_mode<synchronous>, transform_indices = @transform_0, window_bounds = array<i64: 1, 128>}, {pipeline_mode = #tpu.pipeline_mode<synchronous>, transform_indices = @transform_1, window_bounds = array<i64: 1, 128>}, {pipeline_mode = #tpu.pipeline_mode<synchronous>, transform_indices = @transform_2, window_bounds = array<i64: 1, 128>}, {transform_indices = @transform_3, window_bounds = array<i64: 1, 128>}, {transform_indices = @transform_4, window_bounds = array<i64: 1, 128>}, {transform_indices = @transform_5, window_bounds = array<i64: 1, 1, 128>}]} {
    %c0_i32 = arith.constant 0 : i32
    %0 = arith.cmpi eq, %arg1, %c0_i32 : i32
    %1 = arith.extui %0 : i1 to i32
    %c0_i32_0 = arith.constant 0 : i32
    %2 = arith.cmpi ne, %1, %c0_i32_0 : i32
    scf.if %2 {
      %cst_13 = arith.constant 0.000000e+00 : f32
      %25 = vector.broadcast %cst_13 : f32 to vector<1x128xf32>
      %c0_14 = arith.constant 0 : index
      %c0_15 = arith.constant 0 : index
      %26 = vector.load %arg8[%c0_14, %c0_15] : memref<1x128xf32, #tpu.memory_space<vmem>>, vector<1x128xf32>
      tpu.vector_store %arg8[%c0_14, %c0_15], %25 {strides = array<i32>} : memref<1x128xf32, #tpu.memory_space<vmem>>, vector<1x128xf32>,
    } else {
    }
    %c1_i32 = arith.constant 1 : i32
    %3 = arith.muli %arg0, %c1_i32 : i32
    %4 = arith.addi %3, %arg1 : i32
    %c1_i32_1 = arith.constant 1 : i32
    %5 = arith.muli %4, %c1_i32_1 : i32
    %6 = tpu.iota {dimensions = array<i32: 0>} : vector<1x128xi32>
    %7 = vector.broadcast %5 : i32 to vector<1x128xi32>
    %8 = arith.addi %6, %7 : vector<1x128xi32>
    %c0 = arith.constant 0 : index
    %c0_2 = arith.constant 0 : index
    %9 = vector.load %arg5[%c0, %c0_2] : memref<1x128xf32, #tpu.memory_space<vmem>>, vector<1x128xf32>
    %c0_3 = arith.constant 0 : index
    %c0_4 = arith.constant 0 : index
    %10 = vector.load %arg6[%c0_3, %c0_4] : memref<1x128xf32, #tpu.memory_space<vmem>>, vector<1x128xf32>
    %11 = arith.subf %9, %10 : vector<1x128xf32>
    %c1_i32_5 = arith.constant 1 : i32
    %12 = vector.broadcast %c1_i32_5 : i32 to vector<1x128xi32>
    %13 = arith.cmpi slt, %8, %12 : vector<1x128xi32>
    %14 = math.absf %11 : vector<1x128xf32>
    %cst = arith.constant 0.000000e+00 : f32
    %15 = vector.broadcast %cst : f32 to vector<1x128xf32>
    %16 = arith.select %13, %14, %15 : vector<1x128xi1>, vector<1x128xf32>
    %c0_6 = arith.constant 0 : index
    %c0_7 = arith.constant 0 : index
    %17 = vector.load %arg8[%c0_6, %c0_7] : memref<1x128xf32, #tpu.memory_space<vmem>>, vector<1x128xf32>
    %cst_8 = arith.constant dense<0.000000e+00> : vector<128xf32>
    %18 = vector.multi_reduction <add>, %16, %cst_8 [0] : vector<1x128xf32> to vector<128xf32>
    %19 = vector.shape_cast %18 : vector<128xf32> to vector<1x128xf32>
    %20 = arith.addf %17, %19 : vector<1x128xf32>
    %c0_9 = arith.constant 0 : index
    %c0_10 = arith.constant 0 : index
    %21 = vector.load %arg8[%c0_9, %c0_10] : memref<1x128xf32, #tpu.memory_space<vmem>>, vector<1x128xf32>
    tpu.vector_store %arg8[%c0_9, %c0_10], %20 {strides = array<i32>} : memref<1x128xf32, #tpu.memory_space<vmem>>, vector<1x128xf32>,
    %c0_i32_11 = arith.constant 0 : i32
    %22 = arith.cmpi eq, %arg1, %c0_i32_11 : i32
    %23 = arith.extui %22 : i1 to i32
    %c0_i32_12 = arith.constant 0 : i32
    %24 = arith.cmpi ne, %23, %c0_i32_12 : i32
    scf.if %24 {
      %c0_13 = arith.constant 0 : index
      %c0_14 = arith.constant 0 : index
      %25 = vector.load %arg8[%c0_13, %c0_14] : memref<1x128xf32, #tpu.memory_space<vmem>>, vector<1x128xf32>
      %26 = vector.shape_cast %25 : vector<1x128xf32> to vector<1x1x128xf32>
      %cst_15 = arith.constant dense<0.000000e+00> : vector<1xf32>
      %27 = vector.multi_reduction <add>, %26, %cst_15 [1, 2] : vector<1x1x128xf32> to vector<1xf32>
      %28 = vector.shape_cast %27 : vector<1xf32> to vector<1x1x1xf32>
      %29 = vector.extract %28[0, 0, 0] : f32 from vector<1x1x1xf32>
      %cst_16 = arith.constant 0.020833334 : f32
      %30 = arith.mulf %29, %cst_16 : f32
      %31 = tpu.iota {dimensions = array<i32: 2>} : vector<1x1x128xi32>
      %c0_i32_17 = arith.constant 0 : i32
      %32 = arith.cmpi eq, %arg0, %c0_i32_17 : i32
      %33 = arith.extui %32 : i1 to i32
      %c0_i32_18 = arith.constant 0 : i32
      %34 = arith.cmpi ne, %33, %c0_i32_18 : i32
      scf.if %34 {
        %c0_21 = arith.constant 0 : index
        %c0_22 = arith.constant 0 : index
        %38 = vector.load %arg2[%c0_21, %c0_22] : memref<1x128xf32, #tpu.memory_space<vmem>>, vector<1x128xf32>
        %c0_23 = arith.constant 0 : index
        %c0_24 = arith.constant 0 : index
        %39 = vector.load %arg3[%c0_23, %c0_24] : memref<1x128xf32, #tpu.memory_space<vmem>>, vector<1x128xf32>
        %40 = arith.subf %38, %39 : vector<1x128xf32>
        %c0_25 = arith.constant 0 : index
        %c0_26 = arith.constant 0 : index
        %41 = vector.load %arg4[%c0_25, %c0_26] : memref<1x128xf32, #tpu.memory_space<vmem>>, vector<1x128xf32>
        %42 = arith.divf %40, %41 : vector<1x128xf32>
        %43 = math.absf %42 : vector<1x128xf32>
        %44 = vector.shape_cast %43 : vector<1x128xf32> to vector<1x1x128xf32>
        %cst_27 = arith.constant dense<0.000000e+00> : vector<1xf32>
        %45 = vector.multi_reduction <add>, %44, %cst_27 [1, 2] : vector<1x1x128xf32> to vector<1xf32>
        %46 = vector.shape_cast %45 : vector<1xf32> to vector<1x1x1xf32>
        %47 = vector.extract %46[0, 0, 0] : f32 from vector<1x1x1xf32>
        %cst_28 = arith.constant 1.250000e-01 : f32
        %48 = arith.mulf %47, %cst_28 : f32
        %c0_i32_29 = arith.constant 0 : i32
        %49 = vector.broadcast %c0_i32_29 : i32 to vector<1x1x128xi32>
        %50 = arith.cmpi eq, %31, %49 : vector<1x1x128xi32>
        %c1_i32_30 = arith.constant 1 : i32
        %51 = vector.broadcast %c1_i32_30 : i32 to vector<1x1x128xi32>
        %52 = arith.cmpi eq, %31, %51 : vector<1x1x128xi32>
        %cst_31 = arith.constant 0.000000e+00 : f32
        %53 = vector.broadcast %30 : f32 to vector<1x1x128xf32>
        %54 = vector.broadcast %cst_31 : f32 to vector<1x1x128xf32>
        %55 = arith.select %52, %53, %54 : vector<1x1x128xi1>, vector<1x1x128xf32>
        %56 = vector.broadcast %48 : f32 to vector<1x1x128xf32>
        %57 = arith.select %50, %56, %55 : vector<1x1x128xi1>, vector<1x1x128xf32>
        %c0_32 = arith.constant 0 : index
        %c0_33 = arith.constant 0 : index
        %c0_34 = arith.constant 0 : index
        %58 = vector.load %arg7[%c0_32, %c0_33, %c0_34] : memref<1x1x128xf32, #tpu.memory_space<vmem>>, vector<1x1x128xf32>
        tpu.vector_store %arg7[%c0_32, %c0_33, %c0_34], %57 {strides = array<i32>} : memref<1x1x128xf32, #tpu.memory_space<vmem>>, vector<1x1x128xf32>,
      } else {
      }
      %c0_i32_19 = arith.constant 0 : i32
      %35 = arith.cmpi sgt, %arg0, %c0_i32_19 : i32
      %36 = arith.extui %35 : i1 to i32
      %c0_i32_20 = arith.constant 0 : i32
      %37 = arith.cmpi ne, %36, %c0_i32_20 : i32
      scf.if %37 {
        %c1_i32_21 = arith.constant 1 : i32
        %38 = vector.broadcast %c1_i32_21 : i32 to vector<1x1x128xi32>
        %39 = arith.cmpi eq, %31, %38 : vector<1x1x128xi32>
        %cst_22 = arith.constant 0.000000e+00 : f32
        %40 = vector.broadcast %30 : f32 to vector<1x1x128xf32>
        %41 = vector.broadcast %cst_22 : f32 to vector<1x1x128xf32>
        %42 = arith.select %39, %40, %41 : vector<1x1x128xi1>, vector<1x1x128xf32>
        %c0_23 = arith.constant 0 : index
        %c0_24 = arith.constant 0 : index
        %c0_25 = arith.constant 0 : index
        %43 = vector.load %arg7[%c0_23, %c0_24, %c0_25] : memref<1x1x128xf32, #tpu.memory_space<vmem>>, vector<1x1x128xf32>
        tpu.vector_store %arg7[%c0_23, %c0_24, %c0_25], %42 {strides = array<i32>} : memref<1x1x128xf32, #tpu.memory_space<vmem>>, vector<1x1x128xf32>,
      } else {
      }
    } else {
    }
    return
  }
  func.func @transform_0(%arg0: i32, %arg1: i32) -> (i32, i32) {
    %c0_i32 = arith.constant 0 : i32
    %c0_i32_0 = arith.constant 0 : i32
    %c0_i32_1 = arith.constant 0 : i32
    return %c0_i32, %c0_i32_0 : i32, i32
  }
  func.func @transform_1(%arg0: i32, %arg1: i32) -> (i32, i32) {
    %c0_i32 = arith.constant 0 : i32
    %c0_i32_0 = arith.constant 0 : i32
    %c0_i32_1 = arith.constant 0 : i32
    return %c0_i32, %c0_i32_0 : i32, i32
  }
  func.func @transform_2(%arg0: i32, %arg1: i32) -> (i32, i32) {
    %c0_i32 = arith.constant 0 : i32
    %c0_i32_0 = arith.constant 0 : i32
    %c0_i32_1 = arith.constant 0 : i32
    return %c0_i32, %c0_i32_0 : i32, i32
  }
  func.func @transform_3(%arg0: i32, %arg1: i32) -> (i32, i32) {
    %c1_i32 = arith.constant 1 : i32
    %0 = arith.muli %arg0, %c1_i32 : i32
    %1 = arith.addi %0, %arg1 : i32
    %c0_i32 = arith.constant 0 : i32
    %2 = arith.minsi %1, %c0_i32 : i32
    %c0_i32_0 = arith.constant 0 : i32
    %c0_i32_1 = arith.constant 0 : i32
    return %2, %c0_i32_0 : i32, i32
  }
  func.func @transform_4(%arg0: i32, %arg1: i32) -> (i32, i32) {
    %c1_i32 = arith.constant 1 : i32
    %0 = arith.muli %arg0, %c1_i32 : i32
    %1 = arith.addi %0, %arg1 : i32
    %c0_i32 = arith.constant 0 : i32
    %2 = arith.minsi %1, %c0_i32 : i32
    %c0_i32_0 = arith.constant 0 : i32
    %c0_i32_1 = arith.constant 0 : i32
    return %2, %c0_i32_0 : i32, i32
  }
  func.func @transform_5(%arg0: i32, %arg1: i32) -> (i32, i32, i32) {
    %c0_i32 = arith.constant 0 : i32
    %c0_i32_0 = arith.constant 0 : i32
    %c0_i32_1 = arith.constant 0 : i32
    return %arg0, %c0_i32, %c0_i32_0 : i32, i32, i32
  }
}

</mosaic_0001>

<llo_original>
// kernel: tpu_custom_call.1
$region0: #{tpu_custom_call.1}
  #allocation0 [shape = 'u32[]', space=smem, size = 0x4, offset = 0x4, fixed_abs, tag = 'smem constant byte address 0x4 - core index']
  #allocation1 [shape = 'u32[72,128]{1,0:T(1,128)}', space=vmem, size = 0x9000, scoped, tag = 'internal scratch']
  #allocation2 [shape = 'f32[1,128]{1,0:T(1,128)}', space=vmem, size = 0x200, scoped, tag = 'scratch operand']
  %s0 = inlined_call_operand.hbm [shape: f32[1,128], index: 0, kind: input, shape index: {}]
  %s1 = inlined_call_operand.hbm [shape: f32[1,128], index: 1, kind: input, shape index: {}]
  %s2 = inlined_call_operand.vmem [shape: f32[1,128], index: 2, kind: input, shape index: {}]
  %s3 = inlined_call_operand.vmem [shape: f32[1,128], index: 3, kind: input, shape index: {}]
  %s4 = inlined_call_operand.vmem [shape: f32[1,128], index: 4, kind: input, shape index: {}]
  %s5 = inlined_call_operand.hbm [shape: f32[1,1,128], index: 5, kind: output, shape index: {}]
  %s6 = sld [smem:[#allocation0]]
  $region54: #{tpu_custom_call.1} parent=0
    _
  %s8 = ssub.s32 1, %s6
  %s9 = scalar_select 0, %s8, %s6
  $region1: #{tpu_custom_call.1} parent=0
    #allocation3 [shape = 'u8[512]{0}', space=vmem, size = 0x400, scoped, tag = 'input window, operand 0, single buffered']
    #allocation4 [shape = 's32[1]{0}', space=sflag, size = 0x4, scoped, tag = 'scoped memory for tpu_custom_call.1']
    #allocation5 [shape = 's32[1]{0}', space=sflag, size = 0x4, scoped, tag = 'scoped memory for tpu_custom_call.1']
    #allocation6 [shape = 'u8[512]{0}', space=vmem, size = 0x400, scoped, tag = 'input window, operand 1, single buffered']
    #allocation7 [shape = 's32[1]{0}', space=sflag, size = 0x4, scoped, tag = 'scoped memory for tpu_custom_call.1']
    #allocation8 [shape = 'u8[512]{0}', space=vmem, size = 0x400, scoped, tag = 'output window, operand 0, single buffered']
    %10 = vsyncpa [#allocation4], 0
    %11 = vsyncpa [#allocation7], 0
    %12 = vsyncpa [#allocation5], 0
    // Predicated region
    $region2: #{tpu_custom_call.1} parent=1 // pred_check
      _
    $region3: #{tpu_custom_call.1} parent=1 // pred_check_branch
      %14 = sbr.rel (0) target = $region5
    $region4: #{tpu_custom_call.1} parent=1 // pred_region
      %16 = vsyncadd [#allocation4], 0
      %s18 = sshll.u32 %s0, 4
      %s19 = int_to_ptr.hbm [resolvable:$true] %s18
      %s20 = sshll.u32 [#allocation3], 4
      %s21 = int_to_ptr.vmem [resolvable:$true] %s20
      %23 = dma.hbm_to_vmem [thread:$0]  %s19, 16, %s21, [#allocation4]
    $region5: #{tpu_custom_call.1} parent=1 // pred_fallthru
      _
    // Predicated region
    $region6: #{tpu_custom_call.1} parent=1 // pred_check
      _
    $region7: #{tpu_custom_call.1} parent=1 // pred_check_branch
      %25 = sbr.rel (0) target = $region9
    $region8: #{tpu_custom_call.1} parent=1 // pred_region
      %27 = vsyncadd [#allocation7], 0
      %s29 = sshll.u32 %s1, 4
      %s30 = int_to_ptr.hbm [resolvable:$true] %s29
      %s31 = sshll.u32 [#allocation6], 4
      %s32 = int_to_ptr.vmem [resolvable:$true] %s31
      %34 = dma.hbm_to_vmem [thread:$0]  %s30, 16, %s32, [#allocation7]
    $region9: #{tpu_custom_call.1} parent=1 // pred_fallthru
      _
    // Predicated region
    $region10: #{tpu_custom_call.1} parent=1 // pred_check
      _
    $region11: #{tpu_custom_call.1} parent=1 // pred_check_branch
      %36 = sbr.rel (0) target = $region13
    $region12: #{tpu_custom_call.1} parent=1 // pred_region
      _
    $region13: #{tpu_custom_call.1} parent=1 // pred_fallthru
      _
    // Predicated region
    $region14: #{tpu_custom_call.1} parent=1 // pred_check
      _
    $region15: #{tpu_custom_call.1} parent=1 // pred_check_branch
      %38 = sbr.rel (0) target = $region17
    $region16: #{tpu_custom_call.1} parent=1 // pred_region
      %s39 = sadd.s32 0, 0
      %p40 = scmp.lt.s32.totalorder %s39, 0
      %s41 = scalar_select %p40, %s39, 0
      %p42 = scmp.lt.s32.totalorder %s41, 0
      %s43 = scalar_select %p42, %s41, 0
      %s44 = scalar_lea.vmem %s3, %s43
      %s45 = sadd.s32 0, 0
      %p46 = scmp.lt.s32.totalorder %s45, 0
      %s47 = scalar_select %p46, %s45, 0
    $region17: #{tpu_custom_call.1} parent=1 // pred_fallthru
      _
    // Predicated region
    $region18: #{tpu_custom_call.1} parent=1 // pred_check
      _
    $region19: #{tpu_custom_call.1} parent=1 // pred_check_branch
      %49 = sbr.rel (0) target = $region21
    $region20: #{tpu_custom_call.1} parent=1 // pred_region
      %s50 = sadd.s32 0, 0
      %p51 = scmp.lt.s32.totalorder %s50, 0
      %s52 = scalar_select %p51, %s50, 0
      %p53 = scmp.lt.s32.totalorder %s52, 0
      %s54 = scalar_select %p53, %s52, 0
      %s55 = scalar_lea.vmem %s4, %s54
      %s56 = sadd.s32 0, 0
      %p57 = scmp.lt.s32.totalorder %s56, 0
      %s58 = scalar_select %p57, %s56, 0
    $region21: #{tpu_custom_call.1} parent=1 // pred_fallthru
      _
    // Predicated region
    $region22: #{tpu_custom_call.1} parent=1 // pred_check
      _
    $region23: #{tpu_custom_call.1} parent=1 // pred_check_branch
      %60 = sbr.rel (0) target = $region25
    $region24: #{tpu_custom_call.1} parent=1 // pred_region
      %62 = dma.done [#allocation4], 16
    $region25: #{tpu_custom_call.1} parent=1 // pred_fallthru
      _
    // Predicated region
    $region26: #{tpu_custom_call.1} parent=1 // pred_check
      _
    $region27: #{tpu_custom_call.1} parent=1 // pred_check_branch
      %64 = sbr.rel (0) target = $region29
    $region28: #{tpu_custom_call.1} parent=1 // pred_region
      %66 = dma.done [#allocation7], 16
    $region29: #{tpu_custom_call.1} parent=1 // pred_fallthru
      _
    %s67 = sadd.s32 0, 0
    %p68 = scmp.lt.s32.totalorder %s67, 0
    %s69 = scalar_select %p68, %s67, 0
    %p70 = scmp.lt.s32.totalorder %s69, 0
    %s71 = scalar_select %p70, %s69, 0
    %s72 = scalar_lea.vmem %s3, %s71
    %s73 = sadd.s32 0, 0
    %p74 = scmp.lt.s32.totalorder %s73, 0
    %s75 = scalar_select %p74, %s73, 0
    %p76 = scmp.lt.s32.totalorder %s75, 0
    %s77 = scalar_select %p76, %s75, 0
    %s78 = scalar_lea.vmem %s4, %s77
    %s79 = sadd.s32 0, 0
    %p80 = scmp.lt.s32.totalorder %s79, 0
    %s81 = scalar_select %p80, %s79, 0
    %p82 = scmp.lt.s32.totalorder %s81, 0
    %s83 = scalar_select %p82, %s81, 0
    %s84 = scalar_lea.vmem %s3, %s83
    %s85 = sadd.s32 0, 0
    %p86 = scmp.lt.s32.totalorder %s85, 0
    %s87 = scalar_select %p86, %s85, 0
    %s88 = sadd.s32 0, 0
    %p89 = scmp.lt.s32.totalorder %s88, 0
    %s90 = scalar_select %p89, %s88, 0
    %p91 = scmp.lt.s32.totalorder %s90, 0
    %s92 = scalar_select %p91, %s90, 0
    %s93 = scalar_lea.vmem %s4, %s92
    %s94 = sadd.s32 0, 0
    %p95 = scmp.lt.s32.totalorder %s94, 0
    %s96 = scalar_select %p95, %s94, 0
    %p97 = scmp.eq.s32.totalorder 0, 0
    // Predicated region
    $region30: #{tpu_custom_call.1} parent=1 // pred_check
      %p98 = pneg %p97
    $region31: #{tpu_custom_call.1} parent=1 // pred_check_branch
      %100 = sbr.rel (%p98) target = $region33
    $region32: #{tpu_custom_call.1} parent=1 // pred_region
      %101 = vst [vmem:[#allocation2] sm:$0x1] 0.0
    $region33: #{tpu_custom_call.1} parent=1 // pred_fallthru
      _
    %s102 = sadd.s32 0, 0
    %v103 = vlaneseq
    %v104 = vshrl.u32 %v103, 7
    %v105 = vstv %s102
    %v106 = vadd.s32 %v104, %v105
    %v107 = vld [vmem:[%s84] sm:$0x1]
    %v108 = vld [vmem:[%s93] sm:$0x1]
    %v109 = vsub.f32 %v107, %v108
    %vm110 = vcmp.lt.s32.totalorder %v106, 1
    %v111 = vand.u32 2147483647, %v109
    %v112 = vsel %vm110, %v111, 0.0
    %v113 = vld [vmem:[#allocation2] sm:$0x1]
    %v114 = vadd.f32 %v112, 0.0
    %v115 = vadd.f32 %v113, %v114
    %116 = vst [vmem:[#allocation2] sm:$0x1] %v115
    // Predicated region
    $region34: #{tpu_custom_call.1} parent=1 // pred_check
      %p117 = pneg %p97
    $region35: #{tpu_custom_call.1} parent=1 // pred_check_branch
      %119 = sbr.rel (%p117) target = $region37
    $region36: #{tpu_custom_call.1} parent=1 // pred_region
      %v120 = vld [vmem:[#allocation2] sm:$0x1]
      %vm121 = vcmask 1040384
      %v122 = vsel %vm121, %v120, 0.0
      %123 = vadd.xlane.f32.xlu0 %v122
      %v124 = vpop.xlane.xlu0 %123
      %v125 = vrot.slane %v124, 4
      %v126 = vadd.f32 %v124, %v125
      %v127 = vrot.slane %v126, 2
      %v128 = vadd.f32 %v126, %v127
      %v129 = vrot.slane %v128, 1
      %v130 = vadd.f32 %v128, %v129
      %s131 = vtos %v130
      %s132 = smul.f32 %s131, 0.020833334
      %v133 = vlaneseq
      %v134 = vand.u32 %v133, 127
      %p135 = scmp.eq.s32.totalorder 0, 0
      // Predicated region
      $region38: #{tpu_custom_call.1} parent=36 // pred_check
        %p136 = pneg %p135
      $region39: #{tpu_custom_call.1} parent=36 // pred_check_branch
        %138 = sbr.rel (%p136) target = $region41
      $region40: #{tpu_custom_call.1} parent=36 // pred_region
        %v139 = vld [vmem:[#allocation3] sm:$0x1]
        %v140 = vld [vmem:[#allocation6] sm:$0x1]
        %v141 = vsub.f32 %v139, %v140
        %v142 = vld [vmem:[%s2] sm:$0x1]
        %v143 = vrcp.pop %v142
        %v144 = vmul.f32 %v142, %v143
        %v145 = vsub.f32 1.0, %v144
        %v146 = vmul.f32 %v143, %v145
        %v147 = vadd.f32 %v143, %v146
        %vm148 = vweird.f32 %v142
        %vm149 = vweird.f32 %v143
        %vm150 = vmor %vm148, %vm149
        %v151 = vsel %vm150, %v143, %v147
        %v152 = vand.u32 2147483647, %v142
        %vm153 = vcmp.eq.f32.partialorder %v152, 8.507059e+37
        %v154 = vand.u32 %v142, 2147483648
        %v155 = vor.u32 1.1754944e-38, %v154
        %v156 = vsel %vm153, %v155, %v151
        %v157 = vmul.f32 %v141, %v156
        %v158 = vand.u32 2147483647, %v157
        %v159 = vsel %vm121, %v158, 0.0
        %160 = vadd.xlane.f32.xlu0 %v159
        %v161 = vpop.xlane.xlu0 %160
        %v162 = vrot.slane %v161, 4
        %v163 = vadd.f32 %v161, %v162
        %v164 = vrot.slane %v163, 2
        %v165 = vadd.f32 %v163, %v164
        %v166 = vrot.slane %v165, 1
        %v167 = vadd.f32 %v165, %v166
        %s168 = vtos %v167
        %s169 = smul.f32 %s168, 0.125
        %vm170 = vcmp.eq.s32.totalorder %v134, 0
        %vm171 = vcmp.eq.s32.totalorder %v134, 1
        %v172 = vstv %s132
        %v173 = vsel %vm171, %v172, 0.0
        %v174 = vstv %s169
        %v175 = vsel %vm170, %v174, %v173
        %176 = vst [vmem:[#allocation8] sm:$0x1] %v175
      $region41: #{tpu_custom_call.1} parent=36 // pred_fallthru
        _
      %p177 = scmp.gt.s32.totalorder 0, 0
      // Predicated region
      $region42: #{tpu_custom_call.1} parent=36 // pred_check
        %p178 = pneg %p177
      $region43: #{tpu_custom_call.1} parent=36 // pred_check_branch
        %180 = sbr.rel (%p178) target = $region45
      $region44: #{tpu_custom_call.1} parent=36 // pred_region
        %vm181 = vcmp.eq.s32.totalorder %v134, 1
        %v182 = vstv %s132
        %v183 = vsel %vm181, %v182, 0.0
        %184 = vst [vmem:[#allocation8] sm:$0x1] %v183
      $region45: #{tpu_custom_call.1} parent=36 // pred_fallthru
        _
    $region37: #{tpu_custom_call.1} parent=1 // pred_fallthru
      _
    // Predicated region
    $region46: #{tpu_custom_call.1} parent=1 // pred_check
      _
    $region47: #{tpu_custom_call.1} parent=1 // pred_check_branch
      %186 = sbr.rel (0) target = $region49
    $region48: #{tpu_custom_call.1} parent=1 // pred_region
      %188 = vsyncadd [#allocation5], 0
      %s190 = sshll.u32 [#allocation8], 4
      %s191 = int_to_ptr.vmem [resolvable:$true] %s190
      %s192 = sshll.u32 %s5, 4
      %s193 = int_to_ptr.hbm [resolvable:$true] %s192
      %195 = dma.vmem_to_hbm [thread:$0]  %s191, 16, %s193, [#allocation5]
    $region49: #{tpu_custom_call.1} parent=1 // pred_fallthru
      _
    // Predicated region
    $region50: #{tpu_custom_call.1} parent=1 // pred_check
      _
    $region51: #{tpu_custom_call.1} parent=1 // pred_check_branch
      %197 = sbr.rel (0) target = $region53
    $region52: #{tpu_custom_call.1} parent=1 // pred_region
      %199 = dma.done [#allocation5], 16
    $region53: #{tpu_custom_call.1} parent=1 // pred_fallthru
      _
    %200 = vsyncpa [#allocation4], 1
    %201 = vsyncpa [#allocation7], 1
    %202 = vsyncpa [#allocation5], 1

</llo_original>
